<compile_context>
chip_gen: v7x
topology: tpu7x:2x2x1
jax: 0.10.0
libtpu: 0.0.40
codegen_flags: <defaults>
</compile_context>

<pallas_src>
import math

import jax
import jax.numpy as jnp
from jax.experimental import pallas as pl
from jax.experimental.pallas import tpu as pltpu


def _cfb_kernel(xr_ref, xc_ref, w1_ref, w2_ref, er_ref, ec_ref, o_ref):
    # xr_ref: (CD, Bt*d)      xr[c*d+k, b*d+i] = x[b,c,i,k]   (row-branch view)
    # xc_ref: (CD, Bt*d)      xc[c*d+k, b*d+j] = x[b,c,k,j]   (col-branch view)
    # w1_ref: (P, CD)         cnn1 weights flattened over (c, k)
    # w2_ref: (P, CD)         cnn2 weights (Laplacian pre-folded when g_flag)
    # er_ref: (Bt*d, Bt*d*d)  block-diag row-broadcast (l pre-folded when g_flag)
    # ec_ref: (Bt*d, Bt*d*d)  block-diag col-broadcast
    # o_ref : (P, Bt*d*d)     lane-dense output slab, o[p, b*d*d + i*d + j]
    r2 = jnp.dot(w1_ref[...], xr_ref[...], preferred_element_type=jnp.float32)
    c2 = jnp.dot(w2_ref[...], xc_ref[...], preferred_element_type=jnp.float32)
    out = (jnp.dot(r2, er_ref[...], preferred_element_type=jnp.float32)
           + jnp.dot(c2, ec_ref[...], preferred_element_type=jnp.float32))
    o_ref[...] = out.astype(o_ref.dtype)


def _pick_batch_tile(B, d):
    """Batches per grid step.  Blocks must stay lane-aligned (bt*d % 128 == 0)
    unless we take a single full-size step.  Prefer >=2 steps so a v7x
    megacore can shard them; otherwise collapse to one step (v5e/v6e have a
    single TensorCore, so minimising step count wins there)."""
    lane_bt = math.lcm(d, 128) // d
    for nb in (2, 4, 8):
        if B % nb == 0 and (B // nb) % lane_bt == 0:
            return B // nb, nb
    return B, 1


def connectome_filter_block(x, l, w1, w2, g_flag, *, precision="bfloat16"):
    """x: (B, C, d, d), l: (d, d), w1/w2: (P, C, d) (Conv2d weights squeezed).
    Returns (B, P, d, d) float32.  precision="bfloat16" casts the branch
    matmul operands to bf16 (f32 accumulation); "float32" keeps everything f32."""
    B, C, d, _ = x.shape
    P = w1.shape[0]
    CD, DD = C * d, d * d
    cdt = jnp.bfloat16 if precision == "bfloat16" else jnp.float32
    hi = jax.lax.Precision.HIGHEST

    bt, nb = _pick_batch_tile(B, d)

    # Lane-dense views with batch fused into lanes (wrapper-side layout plumbing).
    #   xc[c*d+k, b*d+j] = x[b,c,k,j]      xr[c*d+k, b*d+i] = x[b,c,i,k]
    x32 = x.astype(jnp.float32)
    xc = jnp.transpose(x32, (1, 2, 0, 3)).reshape(CD, B * d).astype(cdt)
    xr = jnp.transpose(x32, (1, 3, 0, 2)).reshape(CD, B * d).astype(cdt)

    w1_flat = w1.reshape(P, CD).astype(cdt)

    # Broadcast constants for the lane-dense (P, d*d) slab of each batch:
    #   e_r[i, i*d + j] = 1      e_c[j, i*d + j] = 1
    eye_d = jnp.eye(d, dtype=jnp.float32)
    e_r = jnp.kron(eye_d, jnp.ones((1, d), jnp.float32))        # (d, DD)
    e_c = jnp.kron(jnp.ones((1, d), jnp.float32), eye_d)        # (d, DD)

    if g_flag:
        # Exact algebraic fold of the graph filter x <- l @ x:
        #   column branch: W2'[p,c,m] = sum_k W2[p,c,k] * l[k,m]
        #   row branch:    e_r'[m, i*d+j] = l[i,m]  (applies l after the contraction)
        w2_eff = jnp.einsum("pck,km->pcm", w2.astype(jnp.float32),
                            l.astype(jnp.float32), precision=hi).reshape(P, CD)
        e_r = jnp.repeat(l.astype(jnp.float32).T, d, axis=1)     # (d, DD), exact
    else:
        w2_eff = w2.reshape(P, CD).astype(jnp.float32)
    w2_eff = w2_eff.astype(cdt)

    # Block-diagonal versions covering the bt batches handled per grid step,
    # so the epilogue stays a plain matmul (no in-kernel lane slicing).
    # Kept f32: exact 0/1 (or Laplacian values when folded).
    er_bd = jnp.kron(jnp.eye(bt, dtype=jnp.float32), e_r)       # (bt*d, bt*DD)
    ec_bd = jnp.kron(jnp.eye(bt, dtype=jnp.float32), e_c)       # (bt*d, bt*DD)

    itemsize = jnp.dtype(cdt).itemsize
    cost = pl.CostEstimate(
        flops=4 * P * CD * B * d + 4 * P * (bt * d) * (bt * DD) * nb + P * B * DD,
        transcendentals=0,
        bytes_accessed=((xr.size + xc.size + w1_flat.size + w2_eff.size) * itemsize
                        + (er_bd.size + ec_bd.size) * 4 + P * B * DD * 4))

    out2d = pl.pallas_call(
        _cfb_kernel,
        out_shape=jax.ShapeDtypeStruct((P, B * DD), jnp.float32),
        grid_spec=pltpu.PrefetchScalarGridSpec(
            num_scalar_prefetch=0,
            grid=(nb,),
            in_specs=[
                pl.BlockSpec((CD, bt * d), lambda b: (0, b)),
                pl.BlockSpec((CD, bt * d), lambda b: (0, b)),
                pl.BlockSpec((P, CD), lambda b: (0, 0)),
                pl.BlockSpec((P, CD), lambda b: (0, 0)),
                pl.BlockSpec((bt * d, bt * DD), lambda b: (0, 0)),
                pl.BlockSpec((bt * d, bt * DD), lambda b: (0, 0)),
            ],
            out_specs=pl.BlockSpec((P, bt * DD), lambda b: (0, b)),
        ),
        compiler_params=pltpu.CompilerParams(
            # Disjoint output blocks per step -> v7x megacore can shard them;
            # near-zero measured impact on single-TC v5e/v6e.
            dimension_semantics=("parallel",)),
        cost_estimate=cost,
    )(xr, xc, w1_flat, w2_eff, er_bd, ec_bd)

    # out2d[p, b*DD + i*d + j]  ->  (B, P, d, d)
    return jnp.transpose(out2d.reshape(P, B, d, d), (1, 0, 2, 3))


def reference(x, l, w1_4d, w2_4d, g_flag):
    """Pure-JAX reference matching the PyTorch forward, computed at HIGHEST
    matmul precision so it is a trustworthy near-exact f32 baseline."""
    hi = jax.lax.Precision.HIGHEST
    if g_flag:
        x = jnp.einsum("im,bcmj->bcij", l, x, precision=hi)
    r = jnp.einsum("pck,bcik->bpi", w1_4d[:, :, 0, :], x, precision=hi)
    c = jnp.einsum("pck,bckj->bpj", w2_4d[:, :, :, 0], x, precision=hi)
    return r[:, :, :, None] + c[:, :, None, :]


if __name__ == "__main__":
    # Small shapes consistent with the module:
    #   x -> (B, n_filt, d, d); n_filt == in_channels of both convs.
    B, C, d, P = 2, 4, 16, 8   # batch, n_filt, ROI count d, planes

    key = jax.random.PRNGKey(0)
    kx, kl, k1, k2 = jax.random.split(key, 4)

    x = jax.random.normal(kx, (B, C, d, d), dtype=jnp.float32)

    # Deterministic symmetric graph Laplacian L = D - A.
    a = jax.random.uniform(kl, (d, d), dtype=jnp.float32)
    a = 0.5 * (a + a.T)
    a = a * (1.0 - jnp.eye(d, dtype=jnp.float32))
    l = jnp.diag(jnp.sum(a, axis=1)) - a

    # Conv2d weights (bias=False): cnn1 (P, C, 1, d), cnn2 (P, C, d, 1).
    w1_4d = jax.random.normal(k1, (P, C, 1, d), dtype=jnp.float32) * 0.1
    w2_4d = jax.random.normal(k2, (P, C, d, 1), dtype=jnp.float32) * 0.1
    w1 = w1_4d.reshape(P, C, d)
    w2 = w2_4d.reshape(P, C, d)

    ok = True
    for g_flag in (False, True):
        ref = jax.block_until_ready(reference(x, l, w1_4d, w2_4d, g_flag))
        scale = float(jnp.max(jnp.abs(ref)))
        checks = (
            ("float32", 1e-2),                      # tight: validates layout/algebra
            ("bfloat16", 2e-2 * max(1.0, scale)),   # bf16 operands, f32 accumulation
        )
        for prec, tol in checks:
            out = connectome_filter_block(x, l, w1, w2, g_flag, precision=prec)
            out = jax.block_until_ready(out)
            assert out.shape == (B, P, d, d), out.shape
            err = float(jnp.max(jnp.abs(out - ref)))
            if not (err <= tol):
                ok = False
                print(f"mismatch: g_flag={g_flag} precision={prec} "
                      f"max_abs_err={err:.3e} tol={tol:.3e}")

    if ok:
        print("KERNEL_OK")
</pallas_src>

<mosaic_0001>
module attributes {stable_mosaic.version = 11 : i64} {
  func.func @_cfb_kernel(%arg0: i32, %arg1: memref<64x32xf32, #tpu.memory_space<vmem>>, %arg2: memref<64x32xf32, #tpu.memory_space<vmem>>, %arg3: memref<8x64xf32, #tpu.memory_space<vmem>>, %arg4: memref<8x64xf32, #tpu.memory_space<vmem>>, %arg5: memref<32x512xf32, #tpu.memory_space<vmem>>, %arg6: memref<32x512xf32, #tpu.memory_space<vmem>>, %arg7: memref<8x512xf32, #tpu.memory_space<vmem>>) attributes {dimension_semantics = [#tpu.dimension_semantics<parallel>], iteration_bounds = array<i64: 1>, scalar_prefetch = 0 : i64, scratch_operands = 0 : i64, tpu.core_type = #tpu.core_type<tc>, window_params = [{transform_indices = @transform_0, window_bounds = array<i64: 64, 32>}, {transform_indices = @transform_1, window_bounds = array<i64: 64, 32>}, {pipeline_mode = #tpu.pipeline_mode<synchronous>, transform_indices = @transform_2, window_bounds = array<i64: 8, 64>}, {pipeline_mode = #tpu.pipeline_mode<synchronous>, transform_indices = @transform_3, window_bounds = array<i64: 8, 64>}, {pipeline_mode = #tpu.pipeline_mode<synchronous>, transform_indices = @transform_4, window_bounds = array<i64: 32, 512>}, {pipeline_mode = #tpu.pipeline_mode<synchronous>, transform_indices = @transform_5, window_bounds = array<i64: 32, 512>}, {transform_indices = @transform_6, window_bounds = array<i64: 8, 512>}]} {
    %c0 = arith.constant 0 : index
    %c0_0 = arith.constant 0 : index
    %0 = vector.load %arg3[%c0, %c0_0] : memref<8x64xf32, #tpu.memory_space<vmem>>, vector<8x64xf32>
    %c0_1 = arith.constant 0 : index
    %c0_2 = arith.constant 0 : index
    %1 = vector.load %arg1[%c0_1, %c0_2] : memref<64x32xf32, #tpu.memory_space<vmem>>, vector<64x32xf32>
    %cst = arith.constant dense<0.000000e+00> : vector<8x32xf32>
    %2 = tpu.matmul %0, %1, %cst {dimension_numbers = #tpu.dot_dimension_numbers<[1], [0], [0], [1], [0, 0, 1, 1], [], []>} : vector<8x64xf32>, vector<64x32xf32>, vector<8x32xf32> -> vector<8x32xf32>
    %c0_3 = arith.constant 0 : index
    %c0_4 = arith.constant 0 : index
    %3 = vector.load %arg4[%c0_3, %c0_4] : memref<8x64xf32, #tpu.memory_space<vmem>>, vector<8x64xf32>
    %c0_5 = arith.constant 0 : index
    %c0_6 = arith.constant 0 : index
    %4 = vector.load %arg2[%c0_5, %c0_6] : memref<64x32xf32, #tpu.memory_space<vmem>>, vector<64x32xf32>
    %cst_7 = arith.constant dense<0.000000e+00> : vector<8x32xf32>
    %5 = tpu.matmul %3, %4, %cst_7 {dimension_numbers = #tpu.dot_dimension_numbers<[1], [0], [0], [1], [0, 0, 1, 1], [], []>} : vector<8x64xf32>, vector<64x32xf32>, vector<8x32xf32> -> vector<8x32xf32>
    %c0_8 = arith.constant 0 : index
    %c0_9 = arith.constant 0 : index
    %6 = vector.load %arg5[%c0_8, %c0_9] : memref<32x512xf32, #tpu.memory_space<vmem>>, vector<32x512xf32>
    %cst_10 = arith.constant dense<0.000000e+00> : vector<8x512xf32>
    %7 = tpu.matmul %2, %6, %cst_10 {dimension_numbers = #tpu.dot_dimension_numbers<[1], [0], [0], [1], [0, 0, 1, 1], [], []>} : vector<8x32xf32>, vector<32x512xf32>, vector<8x512xf32> -> vector<8x512xf32>
    %c0_11 = arith.constant 0 : index
    %c0_12 = arith.constant 0 : index
    %8 = vector.load %arg6[%c0_11, %c0_12] : memref<32x512xf32, #tpu.memory_space<vmem>>, vector<32x512xf32>
    %cst_13 = arith.constant dense<0.000000e+00> : vector<8x512xf32>
    %9 = tpu.matmul %5, %8, %cst_13 {dimension_numbers = #tpu.dot_dimension_numbers<[1], [0], [0], [1], [0, 0, 1, 1], [], []>} : vector<8x32xf32>, vector<32x512xf32>, vector<8x512xf32> -> vector<8x512xf32>
    %10 = arith.addf %7, %9 : vector<8x512xf32>
    %c0_14 = arith.constant 0 : index
    %c0_15 = arith.constant 0 : index
    %11 = vector.load %arg7[%c0_14, %c0_15] : memref<8x512xf32, #tpu.memory_space<vmem>>, vector<8x512xf32>
    tpu.vector_store %arg7[%c0_14, %c0_15], %10 {strides = array<i32>} : memref<8x512xf32, #tpu.memory_space<vmem>>, vector<8x512xf32>,
    return
  }
  func.func @transform_0(%arg0: i32) -> (i32, i32) {
    %c0_i32 = arith.constant 0 : i32
    %c0_i32_0 = arith.constant 0 : i32
    return %c0_i32, %arg0 : i32, i32
  }
  func.func @transform_1(%arg0: i32) -> (i32, i32) {
    %c0_i32 = arith.constant 0 : i32
    %c0_i32_0 = arith.constant 0 : i32
    return %c0_i32, %arg0 : i32, i32
  }
  func.func @transform_2(%arg0: i32) -> (i32, i32) {
    %c0_i32 = arith.constant 0 : i32
    %c0_i32_0 = arith.constant 0 : i32
    %c0_i32_1 = arith.constant 0 : i32
    return %c0_i32, %c0_i32_0 : i32, i32
  }
  func.func @transform_3(%arg0: i32) -> (i32, i32) {
    %c0_i32 = arith.constant 0 : i32
    %c0_i32_0 = arith.constant 0 : i32
    %c0_i32_1 = arith.constant 0 : i32
    return %c0_i32, %c0_i32_0 : i32, i32
  }
  func.func @transform_4(%arg0: i32) -> (i32, i32) {
    %c0_i32 = arith.constant 0 : i32
    %c0_i32_0 = arith.constant 0 : i32
    %c0_i32_1 = arith.constant 0 : i32
    return %c0_i32, %c0_i32_0 : i32, i32
  }
  func.func @transform_5(%arg0: i32) -> (i32, i32) {
    %c0_i32 = arith.constant 0 : i32
    %c0_i32_0 = arith.constant 0 : i32
    %c0_i32_1 = arith.constant 0 : i32
    return %c0_i32, %c0_i32_0 : i32, i32
  }
  func.func @transform_6(%arg0: i32) -> (i32, i32) {
    %c0_i32 = arith.constant 0 : i32
    %c0_i32_0 = arith.constant 0 : i32
    return %c0_i32, %arg0 : i32, i32
  }
}

</mosaic_0001>

<llo_original>
// kernel: tpu_custom_call.1
$region0: #{tpu_custom_call.1}
  #allocation0 [shape = 'u32[]', space=smem, size = 0x4, offset = 0x4, fixed_abs, tag = 'smem constant byte address 0x4 - core index']
  #allocation1 [shape = 'u32[144,128]{1,0:T(1,128)}', space=vmem, size = 0x12000, scoped, tag = 'internal scratch']
  %s0 = inlined_call_operand.vmem [shape: f32[64,32], index: 0, kind: input, shape index: {}]
  %s1 = inlined_call_operand.vmem [shape: f32[64,32], index: 1, kind: input, shape index: {}]
  %s2 = inlined_call_operand.vmem [shape: f32[8,64], index: 2, kind: input, shape index: {}]
  %s3 = inlined_call_operand.vmem [shape: f32[8,64], index: 3, kind: input, shape index: {}]
  %s4 = inlined_call_operand.vmem [shape: f32[32,512], index: 4, kind: input, shape index: {}]
  %s5 = inlined_call_operand.hbm [shape: f32[32,512], index: 5, kind: input, shape index: {}]
  %s6 = inlined_call_operand.hbm [shape: f32[8,512], index: 6, kind: output, shape index: {}]
  %s7 = sld [smem:[#allocation0]]
  $region38: #{tpu_custom_call.1} parent=0
    _
  %s9 = ssub.s32 1, %s7
  %s10 = scalar_select 0, %s9, %s7
  $region1: #{tpu_custom_call.1} parent=0
    #allocation2 [shape = 'u8[65536]{0}', space=vmem, size = 0x10000, scoped, tag = 'input window, operand 5, single buffered']
    #allocation3 [shape = 's32[1]{0}', space=sflag, size = 0x4, scoped, tag = 'scoped memory for tpu_custom_call.1']
    #allocation4 [shape = 's32[1]{0}', space=sflag, size = 0x4, scoped, tag = 'scoped memory for tpu_custom_call.1']
    #allocation5 [shape = 'u8[16384]{0}', space=vmem, size = 0x4000, scoped, tag = 'output window, operand 0, single buffered']
    %11 = vsyncpa [#allocation3], 0
    %12 = vsyncpa [#allocation4], 0
    // Predicated region
    $region2: #{tpu_custom_call.1} parent=1 // pred_check
      _
    $region3: #{tpu_custom_call.1} parent=1 // pred_check_branch
      %14 = sbr.rel (0) target = $region5
    $region4: #{tpu_custom_call.1} parent=1 // pred_region
      _
    $region5: #{tpu_custom_call.1} parent=1 // pred_fallthru
      _
    // Predicated region
    $region6: #{tpu_custom_call.1} parent=1 // pred_check
      _
    $region7: #{tpu_custom_call.1} parent=1 // pred_check_branch
      %16 = sbr.rel (0) target = $region9
    $region8: #{tpu_custom_call.1} parent=1 // pred_region
      _
    $region9: #{tpu_custom_call.1} parent=1 // pred_fallthru
      _
    // Predicated region
    $region10: #{tpu_custom_call.1} parent=1 // pred_check
      _
    $region11: #{tpu_custom_call.1} parent=1 // pred_check_branch
      %18 = sbr.rel (0) target = $region13
    $region12: #{tpu_custom_call.1} parent=1 // pred_region
      _
    $region13: #{tpu_custom_call.1} parent=1 // pred_fallthru
      _
    // Predicated region
    $region14: #{tpu_custom_call.1} parent=1 // pred_check
      _
    $region15: #{tpu_custom_call.1} parent=1 // pred_check_branch
      %20 = sbr.rel (0) target = $region17
    $region16: #{tpu_custom_call.1} parent=1 // pred_region
      _
    $region17: #{tpu_custom_call.1} parent=1 // pred_fallthru
      _
    // Predicated region
    $region18: #{tpu_custom_call.1} parent=1 // pred_check
      _
    $region19: #{tpu_custom_call.1} parent=1 // pred_check_branch
      %22 = sbr.rel (0) target = $region21
    $region20: #{tpu_custom_call.1} parent=1 // pred_region
      _
    $region21: #{tpu_custom_call.1} parent=1 // pred_fallthru
      _
    // Predicated region
    $region22: #{tpu_custom_call.1} parent=1 // pred_check
      _
    $region23: #{tpu_custom_call.1} parent=1 // pred_check_branch
      %24 = sbr.rel (0) target = $region25
    $region24: #{tpu_custom_call.1} parent=1 // pred_region
      %s26 = ssub.s32 2048, 2048
      %27 = vsyncadd [#allocation3], %s26
      %s28 = sshll.u32 [#allocation2], 4
      %s29 = int_to_ptr.vmem [resolvable:$true] %s28
      %34 = dma.hbm_to_vmem [thread:$0]  %s5, 2048, %s29, [#allocation3], 512, 512, 32
    $region25: #{tpu_custom_call.1} parent=1 // pred_fallthru
      _
    // Predicated region
    $region26: #{tpu_custom_call.1} parent=1 // pred_check
      _
    $region27: #{tpu_custom_call.1} parent=1 // pred_check_branch
      %36 = sbr.rel (0) target = $region29
    $region28: #{tpu_custom_call.1} parent=1 // pred_region
      %37 = dma.done [#allocation3], 2048
    $region29: #{tpu_custom_call.1} parent=1 // pred_fallthru
      _
    %v38 = vld [vmem:[%s2] sm:$0xff]
    %v39 = vld [vmem:[%s0] sm:$0xff]
    %v40 = vld [vmem:[%s0 + $0x8] sm:$0xff]
    %v41 = vld [vmem:[%s0 + $0x10] sm:$0xff]
    %v42 = vld [vmem:[%s0 + $0x18] sm:$0xff]
    %v43 = vld [vmem:[%s0 + $0x20] sm:$0xff]
    %v44 = vld [vmem:[%s0 + $0x28] sm:$0xff]
    %v45 = vld [vmem:[%s0 + $0x30] sm:$0xff]
    %v46 = vld [vmem:[%s0 + $0x38] sm:$0xff]
    %vm47 = vcmask 523264
    %v49 = vsel %vm47, %v38, 0
    %51 = vmatprep.subr.mxu0 0.0
    %52 = vmatpush1.msra.mxu0 %v39
    %53 = vmatprep.subr.mxu0 0.0
    %54 = vmatpush1.msra.mxu0 %v40
    %55 = vmatprep.subr.mxu0 0.0
    %56 = vmatpush1.msra.mxu0 %v41
    %57 = vmatprep.subr.mxu0 0.0
    %58 = vmatpush1.msra.mxu0 %v42
    %59 = vmatprep.subr.mxu0 0.0
    %60 = vmatpush1.msra.mxu0 %v43
    %61 = vmatprep.subr.mxu0 0.0
    %62 = vmatpush1.msra.mxu0 %v44
    %63 = vmatprep.subr.mxu0 0.0
    %64 = vmatpush1.msra.mxu0 %v45
    %65 = vmatprep.subr.mxu0 0.0
    %66 = vmatpush1.msra.mxu0 %v46
    %67 = vmatprep.subr.mxu0 0.0
    %68 = vmatpush1.msra.mxu0 0.0
    %69 = vmatprep.subr.mxu0 0.0
    %70 = vmatpush1.msra.mxu0 0.0
    %71 = vmatprep.subr.mxu0 0.0
    %72 = vmatpush1.msra.mxu0 0.0
    %73 = vmatprep.subr.mxu0 0.0
    %74 = vmatpush1.msra.mxu0 0.0
    %75 = vmatprep.subr.mxu0 0.0
    %76 = vmatpush1.msra.mxu0 0.0
    %77 = vmatprep.subr.mxu0 0.0
    %78 = vmatpush1.msra.mxu0 0.0
    %79 = vmatprep.subr.mxu0 0.0
    %80 = vmatpush1.msra.mxu0 0.0
    %81 = vmatprep.subr.mxu0 0.0
    %82 = vmatpush1.msra.mxu0 0.0
    %83 = vmatprep.subr.mxu0 0.0
    %84 = vmatpush1.msra.mxu0 0.0
    %85 = vmatprep.subr.mxu0 0.0
    %86 = vmatpush1.msra.mxu0 0.0
    %87 = vmatprep.subr.mxu0 0.0
    %88 = vmatpush1.msra.mxu0 0.0
    %89 = vmatprep.subr.mxu0 0.0
    %90 = vmatpush1.msra.mxu0 0.0
    %91 = vmatprep.subr.mxu0 0.0
    %92 = vmatpush1.msra.mxu0 0.0
    %93 = vmatprep.subr.mxu0 0.0
    %94 = vmatpush1.msra.mxu0 0.0
    %95 = vmatprep.subr.mxu0 0.0
    %96 = vmatpush1.msra.mxu0 0.0
    %97 = vmatprep.subr.mxu0 0.0
    %98 = vmatpush1.msra.mxu0 0.0
    %99 = vmatprep.subr.mxu0 0.0
    %100 = vmatpush1.msra.mxu0 0.0
    %101 = vmatprep.subr.mxu0 0.0
    %102 = vmatpush1.msra.mxu0 0.0
    %103 = vmatprep.subr.mxu0 0.0
    %104 = vmatpush1.msra.mxu0 0.0
    %105 = vmatprep.subr.mxu0 0.0
    %106 = vmatpush1.msra.mxu0 0.0
    %107 = vmatprep.subr.mxu0 0.0
    %108 = vmatpush1.msra.mxu0 0.0
    %109 = vmatprep.subr.mxu0 0.0
    %110 = vmatpush1.msra.mxu0 0.0
    %111 = vmatprep.subr.mxu0 0.0
    %112 = vmatpush1.msra.mxu0 0.0
    %113 = vmatprep.subr.mxu0 0.0
    %114 = vmatpush1.msra.mxu0 0.0
    %115 = vmatprep.mubr.f32.mxu0 0.0
    %116 = vmatmul.mubr.f32.gmra.mrb[0].mxu0 %v49
    %v117 = vpop.f32.mrb[0].mxu0
    %v118 = vadd.f32 0.0, %v117
    %v119 = vpop.f32.mrb[0].mxu0
    %120 = vdwg.mxu0
    %v121 = vld [vmem:[%s3] sm:$0xff]
    %v122 = vld [vmem:[%s1] sm:$0xff]
    %v123 = vld [vmem:[%s1 + $0x8] sm:$0xff]
    %v124 = vld [vmem:[%s1 + $0x10] sm:$0xff]
    %v125 = vld [vmem:[%s1 + $0x18] sm:$0xff]
    %v126 = vld [vmem:[%s1 + $0x20] sm:$0xff]
    %v127 = vld [vmem:[%s1 + $0x28] sm:$0xff]
    %v128 = vld [vmem:[%s1 + $0x30] sm:$0xff]
    %v129 = vld [vmem:[%s1 + $0x38] sm:$0xff]
    %v131 = vsel %vm47, %v121, 0
    %133 = vmatprep.subr.mxu0 0.0
    %134 = vmatpush1.msra.mxu0 %v122
    %135 = vmatprep.subr.mxu0 0.0
    %136 = vmatpush1.msra.mxu0 %v123
    %137 = vmatprep.subr.mxu0 0.0
    %138 = vmatpush1.msra.mxu0 %v124
    %139 = vmatprep.subr.mxu0 0.0
    %140 = vmatpush1.msra.mxu0 %v125
    %141 = vmatprep.subr.mxu0 0.0
    %142 = vmatpush1.msra.mxu0 %v126
    %143 = vmatprep.subr.mxu0 0.0
    %144 = vmatpush1.msra.mxu0 %v127
    %145 = vmatprep.subr.mxu0 0.0
    %146 = vmatpush1.msra.mxu0 %v128
    %147 = vmatprep.subr.mxu0 0.0
    %148 = vmatpush1.msra.mxu0 %v129
    %149 = vmatprep.subr.mxu0 0.0
    %150 = vmatpush1.msra.mxu0 0.0
    %151 = vmatprep.subr.mxu0 0.0
    %152 = vmatpush1.msra.mxu0 0.0
    %153 = vmatprep.subr.mxu0 0.0
    %154 = vmatpush1.msra.mxu0 0.0
    %155 = vmatprep.subr.mxu0 0.0
    %156 = vmatpush1.msra.mxu0 0.0
    %157 = vmatprep.subr.mxu0 0.0
    %158 = vmatpush1.msra.mxu0 0.0
    %159 = vmatprep.subr.mxu0 0.0
    %160 = vmatpush1.msra.mxu0 0.0
    %161 = vmatprep.subr.mxu0 0.0
    %162 = vmatpush1.msra.mxu0 0.0
    %163 = vmatprep.subr.mxu0 0.0
    %164 = vmatpush1.msra.mxu0 0.0
    %165 = vmatprep.subr.mxu0 0.0
    %166 = vmatpush1.msra.mxu0 0.0
    %167 = vmatprep.subr.mxu0 0.0
    %168 = vmatpush1.msra.mxu0 0.0
    %169 = vmatprep.subr.mxu0 0.0
    %170 = vmatpush1.msra.mxu0 0.0
    %171 = vmatprep.subr.mxu0 0.0
    %172 = vmatpush1.msra.mxu0 0.0
    %173 = vmatprep.subr.mxu0 0.0
    %174 = vmatpush1.msra.mxu0 0.0
    %175 = vmatprep.subr.mxu0 0.0
    %176 = vmatpush1.msra.mxu0 0.0
    %177 = vmatprep.subr.mxu0 0.0
    %178 = vmatpush1.msra.mxu0 0.0
    %179 = vmatprep.subr.mxu0 0.0
    %180 = vmatpush1.msra.mxu0 0.0
    %181 = vmatprep.subr.mxu0 0.0
    %182 = vmatpush1.msra.mxu0 0.0
    %183 = vmatprep.subr.mxu0 0.0
    %184 = vmatpush1.msra.mxu0 0.0
    %185 = vmatprep.subr.mxu0 0.0
    %186 = vmatpush1.msra.mxu0 0.0
    %187 = vmatprep.subr.mxu0 0.0
    %188 = vmatpush1.msra.mxu0 0.0
    %189 = vmatprep.subr.mxu0 0.0
    %190 = vmatpush1.msra.mxu0 0.0
    %191 = vmatprep.subr.mxu0 0.0
    %192 = vmatpush1.msra.mxu0 0.0
    %193 = vmatprep.subr.mxu0 0.0
    %194 = vmatpush1.msra.mxu0 0.0
    %195 = vmatprep.subr.mxu0 0.0
    %196 = vmatpush1.msra.mxu0 0.0
    %197 = vmatprep.mubr.f32.mxu0 0.0
    %198 = vmatmul.mubr.f32.gmra.mrb[0].mxu0 %v131
    %v199 = vpop.f32.mrb[0].mxu0
    %v200 = vadd.f32 0.0, %v199
    %v201 = vpop.f32.mrb[0].mxu0
    %202 = vdwg.mxu0
    %v203 = vld [vmem:[%s4] sm:$0xff]
    %v204 = vld [vmem:[%s4 + $0x8] sm:$0xff]
    %v205 = vld [vmem:[%s4 + $0x10] sm:$0xff]
    %v206 = vld [vmem:[%s4 + $0x18] sm:$0xff]
    %v207 = vld [vmem:[%s4 + $0x20] sm:$0xff]
    %v208 = vld [vmem:[%s4 + $0x28] sm:$0xff]
    %v209 = vld [vmem:[%s4 + $0x30] sm:$0xff]
    %v210 = vld [vmem:[%s4 + $0x38] sm:$0xff]
    %v211 = vld [vmem:[%s4 + $0x40] sm:$0xff]
    %v212 = vld [vmem:[%s4 + $0x48] sm:$0xff]
    %v213 = vld [vmem:[%s4 + $0x50] sm:$0xff]
    %v214 = vld [vmem:[%s4 + $0x58] sm:$0xff]
    %v215 = vld [vmem:[%s4 + $0x60] sm:$0xff]
    %v216 = vld [vmem:[%s4 + $0x68] sm:$0xff]
    %v217 = vld [vmem:[%s4 + $0x70] sm:$0xff]
    %v218 = vld [vmem:[%s4 + $0x78] sm:$0xff]
    %v219 = vld [vmem:[#allocation2] sm:$0xff]
    %v220 = vld [vmem:[#allocation2 + $0x8] sm:$0xff]
    %v221 = vld [vmem:[#allocation2 + $0x10] sm:$0xff]
    %v222 = vld [vmem:[#allocation2 + $0x18] sm:$0xff]
    %v223 = vld [vmem:[#allocation2 + $0x20] sm:$0xff]
    %v224 = vld [vmem:[#allocation2 + $0x28] sm:$0xff]
    %v225 = vld [vmem:[#allocation2 + $0x30] sm:$0xff]
    %v226 = vld [vmem:[#allocation2 + $0x38] sm:$0xff]
    %v227 = vld [vmem:[#allocation2 + $0x40] sm:$0xff]
    %v228 = vld [vmem:[#allocation2 + $0x48] sm:$0xff]
    %v229 = vld [vmem:[#allocation2 + $0x50] sm:$0xff]
    %v230 = vld [vmem:[#allocation2 + $0x58] sm:$0xff]
    %v231 = vld [vmem:[#allocation2 + $0x60] sm:$0xff]
    %v232 = vld [vmem:[#allocation2 + $0x68] sm:$0xff]
    %v233 = vld [vmem:[#allocation2 + $0x70] sm:$0xff]
    %v234 = vld [vmem:[#allocation2 + $0x78] sm:$0xff]
    %vm235 = vcmask 261120
    %v237 = vsel %vm235, %v200, 0
    %239 = vmatprep.subr.mxu0 %v220
    %240 = vmatpush1.msra.mxu0 %v219
    %241 = vmatprep.subr.mxu0 %v224
    %242 = vmatpush1.msra.mxu0 %v223
    %243 = vmatprep.subr.mxu0 %v228
    %244 = vmatpush1.msra.mxu0 %v227
    %245 = vmatprep.subr.mxu0 %v232
    %246 = vmatpush1.msra.mxu0 %v231
    %247 = vmatprep.subr.mxu0 0.0
    %248 = vmatpush1.msra.mxu0 0.0
    %249 = vmatprep.subr.mxu0 0.0
    %250 = vmatpush1.msra.mxu0 0.0
    %251 = vmatprep.subr.mxu0 0.0
    %252 = vmatpush1.msra.mxu0 0.0
    %253 = vmatprep.subr.mxu0 0.0
    %254 = vmatpush1.msra.mxu0 0.0
    %255 = vmatprep.subr.mxu0 0.0
    %256 = vmatpush1.msra.mxu0 0.0
    %257 = vmatprep.subr.mxu0 0.0
    %258 = vmatpush1.msra.mxu0 0.0
    %259 = vmatprep.subr.mxu0 0.0
    %260 = vmatpush1.msra.mxu0 0.0
    %261 = vmatprep.subr.mxu0 0.0
    %262 = vmatpush1.msra.mxu0 0.0
    %263 = vmatprep.subr.mxu0 0.0
    %264 = vmatpush1.msra.mxu0 0.0
    %265 = vmatprep.subr.mxu0 0.0
    %266 = vmatpush1.msra.mxu0 0.0
    %267 = vmatprep.subr.mxu0 0.0
    %268 = vmatpush1.msra.mxu0 0.0
    %269 = vmatprep.subr.mxu0 0.0
    %270 = vmatpush1.msra.mxu0 0.0
    %271 = vmatprep.subr.mxu0 0.0
    %272 = vmatpush1.msra.mxu0 0.0
    %273 = vmatprep.subr.mxu0 0.0
    %274 = vmatpush1.msra.mxu0 0.0
    %275 = vmatprep.subr.mxu0 0.0
    %276 = vmatpush1.msra.mxu0 0.0
    %277 = vmatprep.subr.mxu0 0.0
    %278 = vmatpush1.msra.mxu0 0.0
    %279 = vmatprep.subr.mxu0 0.0
    %280 = vmatpush1.msra.mxu0 0.0
    %281 = vmatprep.subr.mxu0 0.0
    %282 = vmatpush1.msra.mxu0 0.0
    %283 = vmatprep.subr.mxu0 0.0
    %284 = vmatpush1.msra.mxu0 0.0
    %285 = vmatprep.subr.mxu0 0.0
    %286 = vmatpush1.msra.mxu0 0.0
    %287 = vmatprep.subr.mxu0 0.0
    %288 = vmatpush1.msra.mxu0 0.0
    %289 = vmatprep.subr.mxu0 0.0
    %290 = vmatpush1.msra.mxu0 0.0
    %291 = vmatprep.subr.mxu0 0.0
    %292 = vmatpush1.msra.mxu0 0.0
    %293 = vmatprep.subr.mxu0 0.0
    %294 = vmatpush1.msra.mxu0 0.0
    %295 = vmatprep.subr.mxu0 0.0
    %296 = vmatpush1.msra.mxu0 0.0
    %297 = vmatprep.subr.mxu0 0.0
    %298 = vmatpush1.msra.mxu0 0.0
    %299 = vmatprep.subr.mxu0 0.0
    %300 = vmatpush1.msra.mxu0 0.0
    %301 = vmatprep.subr.mxu0 0.0
    %302 = vmatpush1.msra.mxu0 0.0
    %303 = vmatprep.mubr.f32.mxu0 0.0
    %304 = vmatmul.mubr.f32.gmra.mrb[0].mxu0 %v237
    %v305 = vpop.f32.mrb[0].mxu0
    %v306 = vadd.f32 0.0, %v305
    %v307 = vpop.f32.mrb[0].mxu0
    %v308 = vadd.f32 0.0, %v307
    %309 = vdwg.mxu0
    %310 = vmatprep.subr.mxu0 %v222
    %311 = vmatpush1.msra.mxu0 %v221
    %312 = vmatprep.subr.mxu0 %v226
    %313 = vmatpush1.msra.mxu0 %v225
    %314 = vmatprep.subr.mxu0 %v230
    %315 = vmatpush1.msra.mxu0 %v229
    %316 = vmatprep.subr.mxu0 %v234
    %317 = vmatpush1.msra.mxu0 %v233
    %318 = vmatprep.subr.mxu0 0.0
    %319 = vmatpush1.msra.mxu0 0.0
    %320 = vmatprep.subr.mxu0 0.0
    %321 = vmatpush1.msra.mxu0 0.0
    %322 = vmatprep.subr.mxu0 0.0
    %323 = vmatpush1.msra.mxu0 0.0
    %324 = vmatprep.subr.mxu0 0.0
    %325 = vmatpush1.msra.mxu0 0.0
    %326 = vmatprep.subr.mxu0 0.0
    %327 = vmatpush1.msra.mxu0 0.0
    %328 = vmatprep.subr.mxu0 0.0
    %329 = vmatpush1.msra.mxu0 0.0
    %330 = vmatprep.subr.mxu0 0.0
    %331 = vmatpush1.msra.mxu0 0.0
    %332 = vmatprep.subr.mxu0 0.0
    %333 = vmatpush1.msra.mxu0 0.0
    %334 = vmatprep.subr.mxu0 0.0
    %335 = vmatpush1.msra.mxu0 0.0
    %336 = vmatprep.subr.mxu0 0.0
    %337 = vmatpush1.msra.mxu0 0.0
    %338 = vmatprep.subr.mxu0 0.0
    %339 = vmatpush1.msra.mxu0 0.0
    %340 = vmatprep.subr.mxu0 0.0
    %341 = vmatpush1.msra.mxu0 0.0
    %342 = vmatprep.subr.mxu0 0.0
    %343 = vmatpush1.msra.mxu0 0.0
    %344 = vmatprep.subr.mxu0 0.0
    %345 = vmatpush1.msra.mxu0 0.0
    %346 = vmatprep.subr.mxu0 0.0
    %347 = vmatpush1.msra.mxu0 0.0
    %348 = vmatprep.subr.mxu0 0.0
    %349 = vmatpush1.msra.mxu0 0.0
    %350 = vmatprep.subr.mxu0 0.0
    %351 = vmatpush1.msra.mxu0 0.0
    %352 = vmatprep.subr.mxu0 0.0
    %353 = vmatpush1.msra.mxu0 0.0
    %354 = vmatprep.subr.mxu0 0.0
    %355 = vmatpush1.msra.mxu0 0.0
    %356 = vmatprep.subr.mxu0 0.0
    %357 = vmatpush1.msra.mxu0 0.0
    %358 = vmatprep.subr.mxu0 0.0
    %359 = vmatpush1.msra.mxu0 0.0
    %360 = vmatprep.subr.mxu0 0.0
    %361 = vmatpush1.msra.mxu0 0.0
    %362 = vmatprep.subr.mxu0 0.0
    %363 = vmatpush1.msra.mxu0 0.0
    %364 = vmatprep.subr.mxu0 0.0
    %365 = vmatpush1.msra.mxu0 0.0
    %366 = vmatprep.subr.mxu0 0.0
    %367 = vmatpush1.msra.mxu0 0.0
    %368 = vmatprep.subr.mxu0 0.0
    %369 = vmatpush1.msra.mxu0 0.0
    %370 = vmatprep.subr.mxu0 0.0
    %371 = vmatpush1.msra.mxu0 0.0
    %372 = vmatprep.subr.mxu0 0.0
    %373 = vmatpush1.msra.mxu0 0.0
    %374 = vmatprep.mubr.f32.mxu0 0.0
    %375 = vmatmul.mubr.f32.gmra.mrb[0].mxu0 %v237
    %v376 = vpop.f32.mrb[0].mxu0
    %v377 = vadd.f32 0.0, %v376
    %v378 = vpop.f32.mrb[0].mxu0
    %v379 = vadd.f32 0.0, %v378
    %380 = vdwg.mxu0
    %v382 = vsel %vm235, %v118, 0
    %384 = vmatprep.subr.mxu0 %v204
    %385 = vmatpush1.msra.mxu0 %v203
    %386 = vmatprep.subr.mxu0 %v208
    %387 = vmatpush1.msra.mxu0 %v207
    %388 = vmatprep.subr.mxu0 %v212
    %389 = vmatpush1.msra.mxu0 %v211
    %390 = vmatprep.subr.mxu0 %v216
    %391 = vmatpush1.msra.mxu0 %v215
    %392 = vmatprep.subr.mxu0 0.0
    %393 = vmatpush1.msra.mxu0 0.0
    %394 = vmatprep.subr.mxu0 0.0
    %395 = vmatpush1.msra.mxu0 0.0
    %396 = vmatprep.subr.mxu0 0.0
    %397 = vmatpush1.msra.mxu0 0.0
    %398 = vmatprep.subr.mxu0 0.0
    %399 = vmatpush1.msra.mxu0 0.0
    %400 = vmatprep.subr.mxu0 0.0
    %401 = vmatpush1.msra.mxu0 0.0
    %402 = vmatprep.subr.mxu0 0.0
    %403 = vmatpush1.msra.mxu0 0.0
    %404 = vmatprep.subr.mxu0 0.0
    %405 = vmatpush1.msra.mxu0 0.0
    %406 = vmatprep.subr.mxu0 0.0
    %407 = vmatpush1.msra.mxu0 0.0
    %408 = vmatprep.subr.mxu0 0.0
    %409 = vmatpush1.msra.mxu0 0.0
    %410 = vmatprep.subr.mxu0 0.0
    %411 = vmatpush1.msra.mxu0 0.0
    %412 = vmatprep.subr.mxu0 0.0
    %413 = vmatpush1.msra.mxu0 0.0
    %414 = vmatprep.subr.mxu0 0.0
    %415 = vmatpush1.msra.mxu0 0.0
    %416 = vmatprep.subr.mxu0 0.0
    %417 = vmatpush1.msra.mxu0 0.0
    %418 = vmatprep.subr.mxu0 0.0
    %419 = vmatpush1.msra.mxu0 0.0
    %420 = vmatprep.subr.mxu0 0.0
    %421 = vmatpush1.msra.mxu0 0.0
    %422 = vmatprep.subr.mxu0 0.0
    %423 = vmatpush1.msra.mxu0 0.0
    %424 = vmatprep.subr.mxu0 0.0
    %425 = vmatpush1.msra.mxu0 0.0
    %426 = vmatprep.subr.mxu0 0.0
    %427 = vmatpush1.msra.mxu0 0.0
    %428 = vmatprep.subr.mxu0 0.0
    %429 = vmatpush1.msra.mxu0 0.0
    %430 = vmatprep.subr.mxu0 0.0
    %431 = vmatpush1.msra.mxu0 0.0
    %432 = vmatprep.subr.mxu0 0.0
    %433 = vmatpush1.msra.mxu0 0.0
    %434 = vmatprep.subr.mxu0 0.0
    %435 = vmatpush1.msra.mxu0 0.0
    %436 = vmatprep.subr.mxu0 0.0
    %437 = vmatpush1.msra.mxu0 0.0
    %438 = vmatprep.subr.mxu0 0.0
    %439 = vmatpush1.msra.mxu0 0.0
    %440 = vmatprep.subr.mxu0 0.0
    %441 = vmatpush1.msra.mxu0 0.0
    %442 = vmatprep.subr.mxu0 0.0
    %443 = vmatpush1.msra.mxu0 0.0
    %444 = vmatprep.subr.mxu0 0.0
    %445 = vmatpush1.msra.mxu0 0.0
    %446 = vmatprep.subr.mxu0 0.0
    %447 = vmatpush1.msra.mxu0 0.0
    %448 = vmatprep.mubr.f32.mxu0 0.0
    %449 = vmatmul.mubr.f32.gmra.mrb[0].mxu0 %v382
    %v450 = vpop.f32.mrb[0].mxu0
    %v451 = vadd.f32 %v306, %v450
    %v452 = vpop.f32.mrb[0].mxu0
    %v453 = vadd.f32 %v308, %v452
    %454 = vdwg.mxu0
    %455 = vmatprep.subr.mxu0 %v206
    %456 = vmatpush1.msra.mxu0 %v205
    %457 = vmatprep.subr.mxu0 %v210
    %458 = vmatpush1.msra.mxu0 %v209
    %459 = vmatprep.subr.mxu0 %v214
    %460 = vmatpush1.msra.mxu0 %v213
    %461 = vmatprep.subr.mxu0 %v218
    %462 = vmatpush1.msra.mxu0 %v217
    %463 = vmatprep.subr.mxu0 0.0
    %464 = vmatpush1.msra.mxu0 0.0
    %465 = vmatprep.subr.mxu0 0.0
    %466 = vmatpush1.msra.mxu0 0.0
    %467 = vmatprep.subr.mxu0 0.0
    %468 = vmatpush1.msra.mxu0 0.0
    %469 = vmatprep.subr.mxu0 0.0
    %470 = vmatpush1.msra.mxu0 0.0
    %471 = vmatprep.subr.mxu0 0.0
    %472 = vmatpush1.msra.mxu0 0.0
    %473 = vmatprep.subr.mxu0 0.0
    %474 = vmatpush1.msra.mxu0 0.0
    %475 = vmatprep.subr.mxu0 0.0
    %476 = vmatpush1.msra.mxu0 0.0
    %477 = vmatprep.subr.mxu0 0.0
    %478 = vmatpush1.msra.mxu0 0.0
    %479 = vmatprep.subr.mxu0 0.0
    %480 = vmatpush1.msra.mxu0 0.0
    %481 = vmatprep.subr.mxu0 0.0
    %482 = vmatpush1.msra.mxu0 0.0
    %483 = vmatprep.subr.mxu0 0.0
    %484 = vmatpush1.msra.mxu0 0.0
    %485 = vmatprep.subr.mxu0 0.0
    %486 = vmatpush1.msra.mxu0 0.0
    %487 = vmatprep.subr.mxu0 0.0
    %488 = vmatpush1.msra.mxu0 0.0
    %489 = vmatprep.subr.mxu0 0.0
    %490 = vmatpush1.msra.mxu0 0.0
    %491 = vmatprep.subr.mxu0 0.0
    %492 = vmatpush1.msra.mxu0 0.0
    %493 = vmatprep.subr.mxu0 0.0
    %494 = vmatpush1.msra.mxu0 0.0
    %495 = vmatprep.subr.mxu0 0.0
    %496 = vmatpush1.msra.mxu0 0.0
    %497 = vmatprep.subr.mxu0 0.0
    %498 = vmatpush1.msra.mxu0 0.0
    %499 = vmatprep.subr.mxu0 0.0
    %500 = vmatpush1.msra.mxu0 0.0
    %501 = vmatprep.subr.mxu0 0.0
    %502 = vmatpush1.msra.mxu0 0.0
    %503 = vmatprep.subr.mxu0 0.0
    %504 = vmatpush1.msra.mxu0 0.0
    %505 = vmatprep.subr.mxu0 0.0
    %506 = vmatpush1.msra.mxu0 0.0
    %507 = vmatprep.subr.mxu0 0.0
    %508 = vmatpush1.msra.mxu0 0.0
    %509 = vmatprep.subr.mxu0 0.0
    %510 = vmatpush1.msra.mxu0 0.0
    %511 = vmatprep.subr.mxu0 0.0
    %512 = vmatpush1.msra.mxu0 0.0
    %513 = vmatprep.subr.mxu0 0.0
    %514 = vmatpush1.msra.mxu0 0.0
    %515 = vmatprep.subr.mxu0 0.0
    %516 = vmatpush1.msra.mxu0 0.0
    %517 = vmatprep.subr.mxu0 0.0
    %518 = vmatpush1.msra.mxu0 0.0
    %519 = vmatprep.mubr.f32.mxu0 0.0
    %520 = vmatmul.mubr.f32.gmra.mrb[0].mxu0 %v382
    %v521 = vpop.f32.mrb[0].mxu0
    %v522 = vadd.f32 %v377, %v521
    %v523 = vpop.f32.mrb[0].mxu0
    %v524 = vadd.f32 %v379, %v523
    %525 = vdwg.mxu0
    %526 = vst [vmem:[#allocation5] sm:$0xff] %v451
    %527 = vst [vmem:[#allocation5 + $0x8] sm:$0xff] %v453
    %528 = vst [vmem:[#allocation5 + $0x10] sm:$0xff] %v522
    %529 = vst [vmem:[#allocation5 + $0x18] sm:$0xff] %v524
    // Predicated region
    $region30: #{tpu_custom_call.1} parent=1 // pred_check
      _
    $region31: #{tpu_custom_call.1} parent=1 // pred_check_branch
      %531 = sbr.rel (0) target = $region33
    $region32: #{tpu_custom_call.1} parent=1 // pred_region
      %s533 = ssub.s32 512, 512
      %534 = vsyncadd [#allocation4], %s533
      %s536 = sshll.u32 [#allocation5], 4
      %s537 = int_to_ptr.vmem [resolvable:$true] %s536
      %539 = dma.vmem_to_hbm [thread:$0]  %s537, 512, %s6, [#allocation4]
    $region33: #{tpu_custom_call.1} parent=1 // pred_fallthru
      _
    // Predicated region
    $region34: #{tpu_custom_call.1} parent=1 // pred_check
      _
    $region35: #{tpu_custom_call.1} parent=1 // pred_check_branch
      %541 = sbr.rel (0) target = $region37
    $region36: #{tpu_custom_call.1} parent=1 // pred_region
      %542 = dma.done [#allocation4], 512
    $region37: #{tpu_custom_call.1} parent=1 // pred_fallthru
      _
    %543 = vsyncpa [#allocation3], 1
    %544 = vsyncpa [#allocation4], 1

</llo_original>
